<compile_context>
chip_gen: v6e
topology: v6e:2x2x1
jax: 0.10.0
libtpu: 0.0.40
codegen_flags: <defaults>
</compile_context>

<pallas_src>
import functools

import jax
import jax.numpy as jnp
from jax.experimental import pallas as pl
from jax.experimental.pallas import tpu as pltpu


def _round_up(x, m):
    return (x + m - 1) // m * m


# ---------------- kernel 1: transfer_i / transfer_q + hierarchical mean pooling ------

def pooling_kernel(
    emb_i_ref,          # (1, TI, E)     bf16 : current title-token tile of sample s
    emb_q_ref,          # (1, GQ_pad, E) bf16 : all query tokens of sample s
    wi_ref, bi_ref,     # transfer_i Linear: (E, E) bf16, (1, E) f32
    wq_ref, bq_ref,     # transfer_q Linear: (E, E) bf16, (1, E) f32
    out_ref,            # (1, 1, 2E) f32 : pooled [mean_title | mean_query] (lane-dense)
    acc_i_ref,          # (1, E) f32 scratch: running per-sample title sum
    acc_q_ref,          # (1, E) f32 scratch: per-sample query sum
    *, gi, gq, n_pad_i, n_pad_q,
):
    f32 = jnp.float32
    k = pl.program_id(1)
    last_k = pl.num_programs(1) - 1

    # ---- title path: transfer_i = tanh(x @ Wi + bi); dropout == identity ----
    h_i = jnp.tanh(
        jnp.dot(emb_i_ref[0], wi_ref[...], preferred_element_type=f32) + bi_ref[...]
    )
    part_i = jnp.sum(h_i, axis=0, keepdims=True)            # (1, E)

    @pl.when(k == 0)
    def _init():
        acc_i_ref[...] = part_i
        # ---- query path (small; its block is resident across k, process once) ----
        h_q = jnp.tanh(
            jnp.dot(emb_q_ref[0], wq_ref[...], preferred_element_type=f32)
            + bq_ref[...]
        )
        acc_q_ref[...] = jnp.sum(h_q, axis=0, keepdims=True)

    @pl.when(k > 0)
    def _accumulate():
        acc_i_ref[...] = acc_i_ref[...] + part_i

    @pl.when(k == last_k)
    def _finalize():
        # Padded token ids are 0 -> padding_idx row of the embedding table (all zeros),
        # so each padded row contributed exactly tanh(bias).  Subtract that closed-form
        # correction once instead of masking every streamed chunk.
        sum_i = acc_i_ref[...]
        if n_pad_i:
            sum_i = sum_i - float(n_pad_i) * jnp.tanh(bi_ref[...])
        sum_q = acc_q_ref[...]
        if n_pad_q:
            sum_q = sum_q - float(n_pad_q) * jnp.tanh(bq_ref[...])
        # staged means over equal-sized groups == single per-sample mean
        p_i = sum_i * (1.0 / gi)                             # (1, E)
        p_q = sum_q * (1.0 / gq)                             # (1, E)
        out_ref[0] = jnp.concatenate([p_i, p_q], axis=-1)    # (1, 2E) f32, 256 lanes


# ---------------- kernel 2: MLP tail, batched over all samples (M = S) ---------------

def mlp_kernel(p_ref, w1_ref, b1_ref, w2_ref, b2_ref, out_ref):
    f32 = jnp.float32
    bf16 = jnp.bfloat16
    p = p_ref[...].astype(bf16)                               # (S, 2E), K=256 MXU push
    h = jnp.dot(p, w1_ref[...], preferred_element_type=f32) + b1_ref[...]
    h = jnp.maximum(h, 0.0).astype(bf16)                      # ReLU; dropout == identity
    out_ref[...] = jnp.dot(h, w2_ref[...], preferred_element_type=f32) + b2_ref[...]


# ---------------- host-side wrapper ---------------------------------------------------

def prepare_params(params):
    """One-time (model-load) dtype preparation: bf16 table/weights, f32 biases."""
    bf16 = jnp.bfloat16
    f32 = jnp.float32
    return {
        "emb": params["emb"].astype(bf16),
        "Wi": params["Wi"].astype(bf16), "bi": params["bi"].astype(f32),
        "Wq": params["Wq"].astype(bf16), "bq": params["bq"].astype(f32),
        "W1": params["W1"].astype(bf16), "b1": params["b1"].astype(f32),
        "W2": params["W2"].astype(bf16), "b2": params["b2"].astype(f32),
    }


def network_forward(input_x, input_x_i, input_x_q, params, *, token_tile=8192):
    """Inference-mode forward of Network. `params` must come from prepare_params()."""
    del input_x  # dead `self.transfer(embedded)` branch in the reference forward
    emb_table = params["emb"]          # bf16, cast once at model-load time
    E = emb_table.shape[1]

    S, Q, T, L = input_x_i.shape
    Sq, Qq, Lq = input_x_q.shape
    assert S == Sq and Q == Qq
    print("size: {}, {}, {}, {}".format(S, Q, T, L))         # mirrors the reference print

    gi = Q * T * L                     # title tokens per sample
    gq = Q * Lq                        # query tokens per sample

    # Balanced, 16-row (bf16 native tile) aligned title-token chunks.
    K = max(1, pl.cdiv(gi, token_tile))
    ti = _round_up(pl.cdiv(gi, K), 16)
    K = pl.cdiv(gi, ti)
    gi_pad = K * ti
    gq_pad = _round_up(gq, 16)

    # ---- glue: pad the cheap int32 ids (NOT the gathered bf16 embeddings), then gather.
    # id 0 == padding_idx row of the table (all zeros), corrected for in the kernel.
    ids_i = input_x_i.reshape(S, gi)
    if gi_pad > gi:
        ids_i = jnp.pad(ids_i, ((0, 0), (0, gi_pad - gi)))
    ids_q = input_x_q.reshape(S, gq)
    if gq_pad > gq:
        ids_q = jnp.pad(ids_q, ((0, 0), (0, gq_pad - gq)))
    emb_i = jnp.take(emb_table, ids_i.reshape(-1), axis=0).reshape(S, gi_pad, E)
    emb_q = jnp.take(emb_table, ids_q.reshape(-1), axis=0).reshape(S, gq_pad, E)

    const2 = lambda s, k: (0, 0)
    pool_kernel = functools.partial(
        pooling_kernel, gi=gi, gq=gq, n_pad_i=gi_pad - gi, n_pad_q=gq_pad - gq
    )

    # TODO(synk): on v7x, if S == 1 the "parallel" sample axis cannot feed the 2nd
    #             TensorCore; a core-parallel split of the token-chunk axis would help.
    pooled = pl.pallas_call(
        pool_kernel,
        out_shape=jax.ShapeDtypeStruct((S, 1, 2 * E), jnp.float32),
        grid=(S, K),
        in_specs=[
            pl.BlockSpec((1, ti, E), lambda s, k: (s, k, 0)),      # streamed title tokens
            pl.BlockSpec((1, gq_pad, E), lambda s, k: (s, 0, 0)),  # per-sample query tokens
            pl.BlockSpec((E, E), const2), pl.BlockSpec((1, E), const2),   # Wi, bi
            pl.BlockSpec((E, E), const2), pl.BlockSpec((1, E), const2),   # Wq, bq
        ],
        out_specs=pl.BlockSpec((1, 1, 2 * E), lambda s, k: (s, 0, 0)),
        scratch_shapes=[
            pltpu.VMEM((1, E), jnp.float32),   # title-path accumulator
            pltpu.VMEM((1, E), jnp.float32),   # query-path pooled sum
        ],
        compiler_params=pltpu.CompilerParams(
            dimension_semantics=("parallel", "arbitrary"),
            vmem_limit_bytes=32 * 1024 * 1024,
        ),
    )(
        emb_i, emb_q,
        params["Wi"], params["bi"],
        params["Wq"], params["bq"],
    )
    pooled = pooled.reshape(S, 2 * E)

    D = params["b1"].shape[-1]
    C = params["b2"].shape[-1]
    const1 = lambda i: (0, 0)
    out = pl.pallas_call(
        mlp_kernel,
        out_shape=jax.ShapeDtypeStruct((S, C), jnp.float32),
        grid=(1,),
        in_specs=[
            pl.BlockSpec((S, 2 * E), const1),                       # pooled vectors
            pl.BlockSpec((2 * E, D), const1), pl.BlockSpec((1, D), const1),  # W1, b1
            pl.BlockSpec((D, C), const1), pl.BlockSpec((1, C), const1),      # W2, b2
        ],
        out_specs=pl.BlockSpec((S, C), const1),
    )(pooled, params["W1"], params["b1"], params["W2"], params["b2"])
    return out


def _reference_forward(input_x_i, input_x_q, p):
    """Pure-JAX reference with the same bf16-prepared params / f32 accumulation."""
    f32 = jnp.float32
    bf16 = jnp.bfloat16
    emb = p["emb"]
    E = emb.shape[1]
    S = input_x_i.shape[0]
    e_i = jnp.take(emb, input_x_i.reshape(-1), axis=0).reshape(S, -1, E)
    e_q = jnp.take(emb, input_x_q.reshape(-1), axis=0).reshape(S, -1, E)
    h_i = jnp.tanh(jnp.dot(e_i, p["Wi"], preferred_element_type=f32) + p["bi"])
    h_q = jnp.tanh(jnp.dot(e_q, p["Wq"], preferred_element_type=f32) + p["bq"])
    pool = jnp.concatenate([h_i.mean(1), h_q.mean(1)], axis=-1).astype(bf16)
    h = jnp.maximum(jnp.dot(pool, p["W1"], preferred_element_type=f32) + p["b1"], 0.0)
    return jnp.dot(h.astype(bf16), p["W2"], preferred_element_type=f32) + p["b2"]


def init_params(key, nb_words, embedding_dim, dense_dim, nb_classes):
    ks = jax.random.split(key, 8)
    scale = 0.02
    emb = scale * jax.random.normal(ks[0], (nb_words, embedding_dim), jnp.float32)
    emb = emb.at[0].set(0.0)  # padding_idx=0 row is zero, as in nn.Embedding
    return {
        "emb": emb,
        "Wi": scale * jax.random.normal(ks[1], (embedding_dim, embedding_dim), jnp.float32),
        "bi": scale * jax.random.normal(ks[2], (1, embedding_dim), jnp.float32),
        "Wq": scale * jax.random.normal(ks[3], (embedding_dim, embedding_dim), jnp.float32),
        "bq": scale * jax.random.normal(ks[4], (1, embedding_dim), jnp.float32),
        "W1": scale * jax.random.normal(ks[5], (2 * embedding_dim, dense_dim), jnp.float32),
        "b1": scale * jax.random.normal(ks[6], (1, dense_dim), jnp.float32),
        "W2": scale * jax.random.normal(ks[7], (dense_dim, nb_classes), jnp.float32),
        "b2": jnp.zeros((1, nb_classes), jnp.float32),
    }


if __name__ == "__main__":
    # small, forward-consistent shapes; L/Lq chosen so the ragged padding path is used
    S, Q, T, L, Lq = 2, 2, 2, 9, 9          # sample, query, title, title_len, query_len
    E, D, C = 128, 128, 2                   # embedding_dim, dense_dim, nb_classes
    NB_WORDS = 1000

    key = jax.random.PRNGKey(0)
    k_ids, k_par = jax.random.split(key)
    ki_x, ki_i, ki_q = jax.random.split(k_ids, 3)

    input_x   = jax.random.randint(ki_x, (S, 8),       0, NB_WORDS, jnp.int32)  # unused path
    input_x_i = jax.random.randint(ki_i, (S, Q, T, L), 0, NB_WORDS, jnp.int32)
    input_x_q = jax.random.randint(ki_q, (S, Q, Lq),   0, NB_WORDS, jnp.int32)

    params = prepare_params(init_params(k_par, NB_WORDS, E, D, C))
    ref = jax.block_until_ready(_reference_forward(input_x_i, input_x_q, params))

    # default tile (single chunk per sample) and a tiny tile (forces K>1 streaming +
    # accumulator + closed-form padding correction)
    out_a = jax.block_until_ready(network_forward(input_x, input_x_i, input_x_q, params))
    out_b = jax.block_until_ready(
        network_forward(input_x, input_x_i, input_x_q, params, token_tile=16)
    )
    for out in (out_a, out_b):
        assert out.shape == (S, C) and out.dtype == jnp.float32
        assert bool(jnp.allclose(out, ref, atol=1e-4, rtol=5e-2)), (out, ref)

    print("KERNEL_OK")
</pallas_src>

<mosaic_0001>
module attributes {stable_mosaic.version = 11 : i64} {
  func.func @pooling_kernel(%arg0: i32, %arg1: i32, %arg2: memref<1x48x128xbf16, #tpu.memory_space<vmem>>, %arg3: memref<1x32x128xbf16, #tpu.memory_space<vmem>>, %arg4: memref<128x128xbf16, #tpu.memory_space<vmem>>, %arg5: memref<1x128xf32, #tpu.memory_space<vmem>>, %arg6: memref<128x128xbf16, #tpu.memory_space<vmem>>, %arg7: memref<1x128xf32, #tpu.memory_space<vmem>>, %arg8: memref<1x1x256xf32, #tpu.memory_space<vmem>>, %arg9: memref<1x128xf32, #tpu.memory_space<vmem>>, %arg10: memref<1x128xf32, #tpu.memory_space<vmem>>) attributes {dimension_semantics = [#tpu.dimension_semantics<parallel>, #tpu.dimension_semantics<arbitrary>], iteration_bounds = array<i64: 2, 1>, scalar_prefetch = 0 : i64, scratch_operands = 2 : i64, tpu.core_type = #tpu.core_type<tc>, window_params = [{transform_indices = @transform_0, window_bounds = array<i64: 1, 48, 128>}, {transform_indices = @transform_1, window_bounds = array<i64: 1, 32, 128>}, {pipeline_mode = #tpu.pipeline_mode<synchronous>, transform_indices = @transform_2, window_bounds = array<i64: 128, 128>}, {pipeline_mode = #tpu.pipeline_mode<synchronous>, transform_indices = @transform_3, window_bounds = array<i64: 1, 128>}, {pipeline_mode = #tpu.pipeline_mode<synchronous>, transform_indices = @transform_4, window_bounds = array<i64: 128, 128>}, {pipeline_mode = #tpu.pipeline_mode<synchronous>, transform_indices = @transform_5, window_bounds = array<i64: 1, 128>}, {transform_indices = @transform_6, window_bounds = array<i64: 1, 1, 256>}]} {
    %c0 = arith.constant 0 : index
    %c0_0 = arith.constant 0 : index
    %c0_1 = arith.constant 0 : index
    %0 = vector.load %arg2[%c0, %c0_0, %c0_1] : memref<1x48x128xbf16, #tpu.memory_space<vmem>>, vector<1x48x128xbf16>
    %1 = vector.shape_cast %0 : vector<1x48x128xbf16> to vector<48x128xbf16>
    %c0_2 = arith.constant 0 : index
    %c0_3 = arith.constant 0 : index
    %2 = vector.load %arg4[%c0_2, %c0_3] : memref<128x128xbf16, #tpu.memory_space<vmem>>, vector<128x128xbf16>
    %cst = arith.constant dense<0.000000e+00> : vector<48x128xf32>
    %3 = tpu.matmul %1, %2, %cst {dimension_numbers = #tpu.dot_dimension_numbers<[1], [0], [0], [1], [0, 0, 1, 1], [], []>} : vector<48x128xbf16>, vector<128x128xbf16>, vector<48x128xf32> -> vector<48x128xf32>
    %c0_4 = arith.constant 0 : index
    %c0_5 = arith.constant 0 : index
    %4 = vector.load %arg5[%c0_4, %c0_5] : memref<1x128xf32, #tpu.memory_space<vmem>>, vector<1x128xf32>
    %5 = vector.broadcast %4 : vector<1x128xf32> to vector<48x128xf32>
    %6 = arith.addf %3, %5 : vector<48x128xf32>
    %7 = math.tanh %6 : vector<48x128xf32>
    %cst_6 = arith.constant dense<0.000000e+00> : vector<128xf32>
    %8 = vector.multi_reduction <add>, %7, %cst_6 [0] : vector<48x128xf32> to vector<128xf32>
    %9 = vector.shape_cast %8 : vector<128xf32> to vector<1x128xf32>
    %c0_i32 = arith.constant 0 : i32
    %10 = arith.cmpi eq, %arg1, %c0_i32 : i32
    %11 = arith.extui %10 : i1 to i32
    %c0_i32_7 = arith.constant 0 : i32
    %12 = arith.cmpi ne, %11, %c0_i32_7 : i32
    scf.if %12 {
      %c0_12 = arith.constant 0 : index
      %c0_13 = arith.constant 0 : index
      %19 = vector.load %arg9[%c0_12, %c0_13] : memref<1x128xf32, #tpu.memory_space<vmem>>, vector<1x128xf32>
      tpu.vector_store %arg9[%c0_12, %c0_13], %9 {strides = array<i32>} : memref<1x128xf32, #tpu.memory_space<vmem>>, vector<1x128xf32>,
      %c0_14 = arith.constant 0 : index
      %c0_15 = arith.constant 0 : index
      %c0_16 = arith.constant 0 : index
      %20 = vector.load %arg3[%c0_14, %c0_15, %c0_16] : memref<1x32x128xbf16, #tpu.memory_space<vmem>>, vector<1x32x128xbf16>
      %21 = vector.shape_cast %20 : vector<1x32x128xbf16> to vector<32x128xbf16>
      %c0_17 = arith.constant 0 : index
      %c0_18 = arith.constant 0 : index
      %22 = vector.load %arg6[%c0_17, %c0_18] : memref<128x128xbf16, #tpu.memory_space<vmem>>, vector<128x128xbf16>
      %cst_19 = arith.constant dense<0.000000e+00> : vector<32x128xf32>
      %23 = tpu.matmul %21, %22, %cst_19 {dimension_numbers = #tpu.dot_dimension_numbers<[1], [0], [0], [1], [0, 0, 1, 1], [], []>} : vector<32x128xbf16>, vector<128x128xbf16>, vector<32x128xf32> -> vector<32x128xf32>
      %c0_20 = arith.constant 0 : index
      %c0_21 = arith.constant 0 : index
      %24 = vector.load %arg7[%c0_20, %c0_21] : memref<1x128xf32, #tpu.memory_space<vmem>>, vector<1x128xf32>
      %25 = vector.broadcast %24 : vector<1x128xf32> to vector<32x128xf32>
      %26 = arith.addf %23, %25 : vector<32x128xf32>
      %27 = math.tanh %26 : vector<32x128xf32>
      %cst_22 = arith.constant dense<0.000000e+00> : vector<128xf32>
      %28 = vector.multi_reduction <add>, %27, %cst_22 [0] : vector<32x128xf32> to vector<128xf32>
      %29 = vector.shape_cast %28 : vector<128xf32> to vector<1x128xf32>
      %c0_23 = arith.constant 0 : index
      %c0_24 = arith.constant 0 : index
      %30 = vector.load %arg10[%c0_23, %c0_24] : memref<1x128xf32, #tpu.memory_space<vmem>>, vector<1x128xf32>
      tpu.vector_store %arg10[%c0_23, %c0_24], %29 {strides = array<i32>} : memref<1x128xf32, #tpu.memory_space<vmem>>, vector<1x128xf32>,
    } else {
    }
    %c0_i32_8 = arith.constant 0 : i32
    %13 = arith.cmpi sgt, %arg1, %c0_i32_8 : i32
    %14 = arith.extui %13 : i1 to i32
    %c0_i32_9 = arith.constant 0 : i32
    %15 = arith.cmpi ne, %14, %c0_i32_9 : i32
    scf.if %15 {
      %c0_12 = arith.constant 0 : index
      %c0_13 = arith.constant 0 : index
      %19 = vector.load %arg9[%c0_12, %c0_13] : memref<1x128xf32, #tpu.memory_space<vmem>>, vector<1x128xf32>
      %20 = arith.addf %19, %9 : vector<1x128xf32>
      %c0_14 = arith.constant 0 : index
      %c0_15 = arith.constant 0 : index
      %21 = vector.load %arg9[%c0_14, %c0_15] : memref<1x128xf32, #tpu.memory_space<vmem>>, vector<1x128xf32>
      tpu.vector_store %arg9[%c0_14, %c0_15], %20 {strides = array<i32>} : memref<1x128xf32, #tpu.memory_space<vmem>>, vector<1x128xf32>,
    } else {
    }
    %c0_i32_10 = arith.constant 0 : i32
    %16 = arith.cmpi eq, %arg1, %c0_i32_10 : i32
    %17 = arith.extui %16 : i1 to i32
    %c0_i32_11 = arith.constant 0 : i32
    %18 = arith.cmpi ne, %17, %c0_i32_11 : i32
    scf.if %18 {
      %c0_12 = arith.constant 0 : index
      %c0_13 = arith.constant 0 : index
      %19 = vector.load %arg9[%c0_12, %c0_13] : memref<1x128xf32, #tpu.memory_space<vmem>>, vector<1x128xf32>
      %c0_14 = arith.constant 0 : index
      %c0_15 = arith.constant 0 : index
      %20 = vector.load %arg5[%c0_14, %c0_15] : memref<1x128xf32, #tpu.memory_space<vmem>>, vector<1x128xf32>
      %21 = math.tanh %20 : vector<1x128xf32>
      %cst_16 = arith.constant 1.200000e+01 : f32
      %22 = vector.broadcast %cst_16 : f32 to vector<1x128xf32>
      %23 = arith.mulf %22, %21 : vector<1x128xf32>
      %24 = arith.subf %19, %23 : vector<1x128xf32>
      %c0_17 = arith.constant 0 : index
      %c0_18 = arith.constant 0 : index
      %25 = vector.load %arg10[%c0_17, %c0_18] : memref<1x128xf32, #tpu.memory_space<vmem>>, vector<1x128xf32>
      %c0_19 = arith.constant 0 : index
      %c0_20 = arith.constant 0 : index
      %26 = vector.load %arg7[%c0_19, %c0_20] : memref<1x128xf32, #tpu.memory_space<vmem>>, vector<1x128xf32>
      %27 = math.tanh %26 : vector<1x128xf32>
      %cst_21 = arith.constant 1.400000e+01 : f32
      %28 = vector.broadcast %cst_21 : f32 to vector<1x128xf32>
      %29 = arith.mulf %28, %27 : vector<1x128xf32>
      %30 = arith.subf %25, %29 : vector<1x128xf32>
      %cst_22 = arith.constant 0.027777778 : f32
      %31 = vector.broadcast %cst_22 : f32 to vector<1x128xf32>
      %32 = arith.mulf %24, %31 : vector<1x128xf32>
      %cst_23 = arith.constant 0.055555556 : f32
      %33 = vector.broadcast %cst_23 : f32 to vector<1x128xf32>
      %34 = arith.mulf %30, %33 : vector<1x128xf32>
      %35 = tpu.concatenate %32, %34 in 1 : vector<1x128xf32>, vector<1x128xf32> -> vector<1x256xf32>
      %c0_24 = arith.constant 0 : index
      %c0_25 = arith.constant 0 : index
      %c0_26 = arith.constant 0 : index
      %36 = vector.load %arg8[%c0_24, %c0_25, %c0_26] : memref<1x1x256xf32, #tpu.memory_space<vmem>>, vector<1x1x256xf32>
      %37 = vector.shape_cast %36 : vector<1x1x256xf32> to vector<1x256xf32>
      %38 = vector.shape_cast %35 : vector<1x256xf32> to vector<1x1x256xf32>
      tpu.vector_store %arg8[%c0_24, %c0_25, %c0_26], %38 {strides = array<i32>} : memref<1x1x256xf32, #tpu.memory_space<vmem>>, vector<1x1x256xf32>,
    } else {
    }
    return
  }
  func.func @transform_0(%arg0: i32, %arg1: i32) -> (i32, i32, i32) {
    %c0_i32 = arith.constant 0 : i32
    %c0_i32_0 = arith.constant 0 : i32
    return %arg0, %arg1, %c0_i32 : i32, i32, i32
  }
  func.func @transform_1(%arg0: i32, %arg1: i32) -> (i32, i32, i32) {
    %c0_i32 = arith.constant 0 : i32
    %c0_i32_0 = arith.constant 0 : i32
    %c0_i32_1 = arith.constant 0 : i32
    return %arg0, %c0_i32, %c0_i32_0 : i32, i32, i32
  }
  func.func @transform_2(%arg0: i32, %arg1: i32) -> (i32, i32) {
    %c0_i32 = arith.constant 0 : i32
    %c0_i32_0 = arith.constant 0 : i32
    %c0_i32_1 = arith.constant 0 : i32
    return %c0_i32, %c0_i32_0 : i32, i32
  }
  func.func @transform_3(%arg0: i32, %arg1: i32) -> (i32, i32) {
    %c0_i32 = arith.constant 0 : i32
    %c0_i32_0 = arith.constant 0 : i32
    %c0_i32_1 = arith.constant 0 : i32
    return %c0_i32, %c0_i32_0 : i32, i32
  }
  func.func @transform_4(%arg0: i32, %arg1: i32) -> (i32, i32) {
    %c0_i32 = arith.constant 0 : i32
    %c0_i32_0 = arith.constant 0 : i32
    %c0_i32_1 = arith.constant 0 : i32
    return %c0_i32, %c0_i32_0 : i32, i32
  }
  func.func @transform_5(%arg0: i32, %arg1: i32) -> (i32, i32) {
    %c0_i32 = arith.constant 0 : i32
    %c0_i32_0 = arith.constant 0 : i32
    %c0_i32_1 = arith.constant 0 : i32
    return %c0_i32, %c0_i32_0 : i32, i32
  }
  func.func @transform_6(%arg0: i32, %arg1: i32) -> (i32, i32, i32) {
    %c0_i32 = arith.constant 0 : i32
    %c0_i32_0 = arith.constant 0 : i32
    %c0_i32_1 = arith.constant 0 : i32
    return %arg0, %c0_i32, %c0_i32_0 : i32, i32, i32
  }
}

</mosaic_0001>

<llo_original>
// kernel: tpu_custom_call.1
$region0: #{tpu_custom_call.1}
  #allocation0 [shape = 'u32[]', space=smem, size = 0x4, offset = 0x4, fixed_abs, tag = 'smem constant byte address 0x4 - core index']
  #allocation1 [shape = 'u32[144,128]{1,0:T(1,128)}', space=vmem, size = 0x12000, scoped, tag = 'internal scratch']
  #allocation2 [shape = 'f32[1,128]{1,0:T(1,128)}', space=vmem, size = 0x200, scoped, tag = 'scratch operand']
  #allocation3 [shape = 'f32[1,128]{1,0:T(1,128)}', space=vmem, size = 0x200, scoped, tag = 'scratch operand']
  %s0 = inlined_call_operand.hbm [shape: bf16[2,48,128], index: 0, kind: input, shape index: {}]
  %s1 = inlined_call_operand.hbm [shape: bf16[2,32,128], index: 1, kind: input, shape index: {}]
  %s2 = inlined_call_operand.hbm [shape: bf16[128,128], index: 2, kind: input, shape index: {}]
  %s3 = inlined_call_operand.vmem [shape: f32[1,128], index: 3, kind: input, shape index: {}]
  %s4 = inlined_call_operand.hbm [shape: bf16[128,128], index: 4, kind: input, shape index: {}]
  %s5 = inlined_call_operand.vmem [shape: f32[1,128], index: 5, kind: input, shape index: {}]
  %s6 = inlined_call_operand.hbm [shape: f32[2,1,256], index: 6, kind: output, shape index: {}]
  %s7 = sld [smem:[#allocation0]]
  $region85: #{tpu_custom_call.1} parent=0
    _
  %s9 = ssub.s32 1, %s7
  %s10 = scalar_select 0, %s9, %s7
  $region1: #{tpu_custom_call.1} parent=0
    #allocation4 [shape = 'u8[24576]{0}', space=vmem, size = 0x6000, scoped, tag = 'input window, operand 0']
    #allocation5 [shape = 's32[2]{0}', space=sflag, size = 0x8, scoped, tag = 'scoped memory for tpu_custom_call.1']
    #allocation6 [shape = 's32[2]{0}', space=sflag, size = 0x8, scoped, tag = 'scoped memory for tpu_custom_call.1']
    #allocation7 [shape = 'u8[16384]{0}', space=vmem, size = 0x4000, scoped, tag = 'input window, operand 1']
    #allocation8 [shape = 's32[2]{0}', space=sflag, size = 0x8, scoped, tag = 'scoped memory for tpu_custom_call.1']
    #allocation9 [shape = 'u8[32768]{0}', space=vmem, size = 0x8000, scoped, tag = 'input window, operand 2, single buffered']
    #allocation10 [shape = 'u8[32768]{0}', space=vmem, size = 0x8000, scoped, tag = 'input window, operand 4, single buffered']
    #allocation11 [shape = 's32[1]{0}', space=sflag, size = 0x4, scoped, tag = 'scoped memory for tpu_custom_call.1']
    #allocation12 [shape = 'u8[2048]{0}', space=vmem, size = 0x800, scoped, tag = 'output window, operand 0']
    %11 = vsyncpa [#allocation5], 0
    %s12 = scalar_lea.sflag [#allocation5], 1
    %13 = vsyncpa %s12, 0
    %14 = vsyncpa [#allocation8], 0
    %s15 = scalar_lea.sflag [#allocation8], 1
    %16 = vsyncpa %s15, 0
    %17 = vsyncpa [#allocation11], 0
    %18 = vsyncpa [#allocation6], 0
    %s19 = scalar_lea.sflag [#allocation6], 1
    %20 = vsyncpa %s19, 0
    loop: start=0, step=1, limit=4
    $region2: #{tpu_custom_call.1} parent=1 // loop_pre_header
      _
    $region3: #{tpu_custom_call.1} parent=1 // loop_header
      %s22 = sphi 0, %s26
      %p23 = scmp.ge.s32.totalorder %s22, 4
      %s29 = sphi 0, %s41
      %s30 = sphi 0, %s37
      %s31 = sphi 0, %s29
      %s32 = sphi 0, %s30
      %s33 = sphi 0, %s31
      %s34 = sphi 0, %s32
      %s46 = sphi 0, %s48
      %s49 = sphi 0, %s46
      %s50 = sphi 0, %s49
      %s66 = sphi 0, %s50
      %s72 = sphi 0, %s74
      %s75 = sphi 0, %s72
      %s76 = sphi 0, %s75
      %s92 = sphi 0, %s76
      %s96 = sphi 0, %s96
      %s98 = sphi 0, %s96
      %s99 = sphi 0, %s98
      %s113 = sphi 0, %s99
      %s117 = sphi 0, %s117
      %s119 = sphi 0, %s117
      %s120 = sphi 0, %s119
      %s134 = sphi 0, %s120
      %s138 = sphi 0, %s138
      %s140 = sphi 0, %s138
      %s141 = sphi 0, %s140
      %s155 = sphi 0, %s141
      %s159 = sphi 0, %s159
      %s161 = sphi 0, %s159
      %s162 = sphi 0, %s161
      %s176 = sphi 0, %s162
      %s182 = sphi 0, %s184
      %s185 = sphi 0, %s182
      %s186 = sphi 0, %s185
      %s202 = sphi 0, %s186
    $region4: #{tpu_custom_call.1} parent=1 // loop_header_branch
      %25 = sbr.rel (%p23) target = $region8
    $region5: #{tpu_custom_call.1} parent=1 // loop_body
      %s27 = ssub.s32 %s22, 1
      %s28 = ssub.s32 %s22, 2
      %s35 = sadd.s32 1, %s30
      %p36 = scmp.ge.s32.totalorder %s35, 1
      %s37 = scalar_select %p36, 0, %s35
      %s38 = sadd.s32 1, %s29
      %s39 = scalar_select %p36, %s38, %s29
      %p40 = scmp.ge.s32.totalorder %s39, 2
      %s41 = scalar_select %p40, 0, %s39
      %s42 = ssub.s32 %s29, %s41
      %s43 = ssub.s32 %s30, %s37
      %s44 = sor.u32 %s42, %s43
      %p45 = scmp.eq.s32.totalorder %s44, 0
      %s47 = sadd.s32 %s46, 1
      %s48 = scalar_select %p45, %s46, %s47
      %p51 = pneg %p45
      %p52 = scmp.eq.s32.totalorder %s22, 1
      %p53 = por %p51, %p52
      %p54 = scmp.ne.s32.totalorder %s46, %s49
      %p55 = scmp.eq.s32.totalorder %s22, 0
      %p56 = por %p54, %p55
      %p57 = scmp.ne.s32.totalorder %s46, %s49
      %p58 = scmp.eq.s32.totalorder %s27, 1
      %p59 = por %p57, %p58
      %p60 = scmp.ne.s32.totalorder %s49, %s50
      %p61 = scmp.eq.s32.totalorder %s27, 0
      %p62 = por %p60, %p61
      %p63 = scmp.ne.s32.totalorder %s49, %s50
      %p64 = scmp.eq.s32.totalorder %s28, 1
      %p65 = por %p63, %p64
      %p67 = scmp.ne.s32.totalorder %s50, %s66
      %p68 = scmp.eq.s32.totalorder %s28, 0
      %p69 = por %p67, %p68
      %s70 = ssub.s32 %s29, %s41
      %p71 = scmp.eq.s32.totalorder %s70, 0
      %s73 = sadd.s32 %s72, 1
      %s74 = scalar_select %p71, %s72, %s73
      %p77 = pneg %p71
      %p78 = scmp.eq.s32.totalorder %s22, 1
      %p79 = por %p77, %p78
      %p80 = scmp.ne.s32.totalorder %s72, %s75
      %p81 = scmp.eq.s32.totalorder %s22, 0
      %p82 = por %p80, %p81
      %p83 = scmp.ne.s32.totalorder %s72, %s75
      %p84 = scmp.eq.s32.totalorder %s27, 1
      %p85 = por %p83, %p84
      %p86 = scmp.ne.s32.totalorder %s75, %s76
      %p87 = scmp.eq.s32.totalorder %s27, 0
      %p88 = por %p86, %p87
      %p89 = scmp.ne.s32.totalorder %s75, %s76
      %p90 = scmp.eq.s32.totalorder %s28, 1
      %p91 = por %p89, %p90
      %p93 = scmp.ne.s32.totalorder %s76, %s92
      %p94 = scmp.eq.s32.totalorder %s28, 0
      %p95 = por %p93, %p94
      %s97 = sadd.s32 %s96, 1
      %p100 = scmp.eq.s32.totalorder %s22, 1
      %p101 = scmp.ne.s32.totalorder %s96, %s98
      %p102 = scmp.eq.s32.totalorder %s22, 0
      %p103 = por %p101, %p102
      %p104 = scmp.ne.s32.totalorder %s96, %s98
      %p105 = scmp.eq.s32.totalorder %s27, 1
      %p106 = por %p104, %p105
      %p107 = scmp.ne.s32.totalorder %s98, %s99
      %p108 = scmp.eq.s32.totalorder %s27, 0
      %p109 = por %p107, %p108
      %p110 = scmp.ne.s32.totalorder %s98, %s99
      %p111 = scmp.eq.s32.totalorder %s28, 1
      %p112 = por %p110, %p111
      %p114 = scmp.ne.s32.totalorder %s99, %s113
      %p115 = scmp.eq.s32.totalorder %s28, 0
      %p116 = por %p114, %p115
      %s118 = sadd.s32 %s117, 1
      %p121 = scmp.eq.s32.totalorder %s22, 1
      %p122 = scmp.ne.s32.totalorder %s117, %s119
      %p123 = scmp.eq.s32.totalorder %s22, 0
      %p124 = por %p122, %p123
      %p125 = scmp.ne.s32.totalorder %s117, %s119
      %p126 = scmp.eq.s32.totalorder %s27, 1
      %p127 = por %p125, %p126
      %p128 = scmp.ne.s32.totalorder %s119, %s120
      %p129 = scmp.eq.s32.totalorder %s27, 0
      %p130 = por %p128, %p129
      %p131 = scmp.ne.s32.totalorder %s119, %s120
      %p132 = scmp.eq.s32.totalorder %s28, 1
      %p133 = por %p131, %p132
      %p135 = scmp.ne.s32.totalorder %s120, %s134
      %p136 = scmp.eq.s32.totalorder %s28, 0
      %p137 = por %p135, %p136
      %s139 = sadd.s32 %s138, 1
      %p142 = scmp.eq.s32.totalorder %s22, 1
      %p143 = scmp.ne.s32.totalorder %s138, %s140
      %p144 = scmp.eq.s32.totalorder %s22, 0
      %p145 = por %p143, %p144
      %p146 = scmp.ne.s32.totalorder %s138, %s140
      %p147 = scmp.eq.s32.totalorder %s27, 1
      %p148 = por %p146, %p147
      %p149 = scmp.ne.s32.totalorder %s140, %s141
      %p150 = scmp.eq.s32.totalorder %s27, 0
      %p151 = por %p149, %p150
      %p152 = scmp.ne.s32.totalorder %s140, %s141
      %p153 = scmp.eq.s32.totalorder %s28, 1
      %p154 = por %p152, %p153
      %p156 = scmp.ne.s32.totalorder %s141, %s155
      %p157 = scmp.eq.s32.totalorder %s28, 0
      %p158 = por %p156, %p157
      %s160 = sadd.s32 %s159, 1
      %p163 = scmp.eq.s32.totalorder %s22, 1
      %p164 = scmp.ne.s32.totalorder %s159, %s161
      %p165 = scmp.eq.s32.totalorder %s22, 0
      %p166 = por %p164, %p165
      %p167 = scmp.ne.s32.totalorder %s159, %s161
      %p168 = scmp.eq.s32.totalorder %s27, 1
      %p169 = por %p167, %p168
      %p170 = scmp.ne.s32.totalorder %s161, %s162
      %p171 = scmp.eq.s32.totalorder %s27, 0
      %p172 = por %p170, %p171
      %p173 = scmp.ne.s32.totalorder %s161, %s162
      %p174 = scmp.eq.s32.totalorder %s28, 1
      %p175 = por %p173, %p174
      %p177 = scmp.ne.s32.totalorder %s162, %s176
      %p178 = scmp.eq.s32.totalorder %s28, 0
      %p179 = por %p177, %p178
      %s180 = ssub.s32 %s29, %s41
      %p181 = scmp.eq.s32.totalorder %s180, 0
      %s183 = sadd.s32 %s182, 1
      %s184 = scalar_select %p181, %s182, %s183
      %p187 = pneg %p181
      %p188 = scmp.eq.s32.totalorder %s22, 1
      %p189 = por %p187, %p188
      %p190 = scmp.ne.s32.totalorder %s182, %s185
      %p191 = scmp.eq.s32.totalorder %s22, 0
      %p192 = por %p190, %p191
      %p193 = scmp.ne.s32.totalorder %s182, %s185
      %p194 = scmp.eq.s32.totalorder %s27, 1
      %p195 = por %p193, %p194
      %p196 = scmp.ne.s32.totalorder %s185, %s186
      %p197 = scmp.eq.s32.totalorder %s27, 0
      %p198 = por %p196, %p197
      %p199 = scmp.ne.s32.totalorder %s185, %s186
      %p200 = scmp.eq.s32.totalorder %s28, 1
      %p201 = por %p199, %p200
      %p203 = scmp.ne.s32.totalorder %s186, %s202
      %p204 = scmp.eq.s32.totalorder %s28, 0
      %p205 = por %p203, %p204
      %p206 = scmp.le.s32.totalorder 1, %s22
      %p207 = scmp.lt.s32.totalorder %s22, 3
      %p208 = pnand %p206, %p207
      %p209 = pneg %p208
      // Predicated region
      $region9: #{tpu_custom_call.1} parent=5 // pred_check
        _
      $region10: #{tpu_custom_call.1} parent=5 // pred_check_branch
        %211 = sbr.rel (%p208) target = $region12
      $region11: #{tpu_custom_call.1} parent=5 // pred_region
        %s212 = ssub.s32 %s22, 1
        // Predicated region
        $region13: #{tpu_custom_call.1} parent=11 // pred_check
          %p213 = pneg %p109
        $region14: #{tpu_custom_call.1} parent=11 // pred_check_branch
          %215 = sbr.rel (%p213) target = $region16
        $region15: #{tpu_custom_call.1} parent=11 // pred_region
          %s217 = ssub.s32 1024, 1024
          %218 = vsyncadd [#allocation8], %s217
          %s219 = sshll.u32 [#allocation9], 4
          %s220 = int_to_ptr.vmem [resolvable:$true] %s219
          %225 = dma.hbm_to_vmem [thread:$0]  %s2, 1024, %s220, [#allocation8], 64, 64, 4
        $region16: #{tpu_custom_call.1} parent=11 // pred_fallthru
          _
        // Predicated region
        $region17: #{tpu_custom_call.1} parent=11 // pred_check
          %p226 = pneg %p130
        $region18: #{tpu_custom_call.1} parent=11 // pred_check_branch
          %228 = sbr.rel (%p226) target = $region20
        $region19: #{tpu_custom_call.1} parent=11 // pred_region
          _
        $region20: #{tpu_custom_call.1} parent=11 // pred_fallthru
          _
        // Predicated region
        $region21: #{tpu_custom_call.1} parent=11 // pred_check
          %p229 = pneg %p151
        $region22: #{tpu_custom_call.1} parent=11 // pred_check_branch
          %231 = sbr.rel (%p229) target = $region24
        $region23: #{tpu_custom_call.1} parent=11 // pred_region
          %s233 = ssub.s32 1024, 1024
          %234 = vsyncadd [#allocation11], %s233
          %s235 = sshll.u32 [#allocation10], 4
          %s236 = int_to_ptr.vmem [resolvable:$true] %s235
          %241 = dma.hbm_to_vmem [thread:$0]  %s4, 1024, %s236, [#allocation11], 64, 64, 4
        $region24: #{tpu_custom_call.1} parent=11 // pred_fallthru
          _
        // Predicated region
        $region25: #{tpu_custom_call.1} parent=11 // pred_check
          %p242 = pneg %p172
        $region26: #{tpu_custom_call.1} parent=11 // pred_check_branch
          %244 = sbr.rel (%p242) target = $region28
        $region27: #{tpu_custom_call.1} parent=11 // pred_region
          _
        $region28: #{tpu_custom_call.1} parent=11 // pred_fallthru
          _
      $region12: #{tpu_custom_call.1} parent=5 // pred_fallthru
        _
      %p245 = scmp.lt.s32.totalorder %s22, 2
      // Predicated region
      $region29: #{tpu_custom_call.1} parent=5 // pred_check
        %p246 = pneg %p245
      $region30: #{tpu_custom_call.1} parent=5 // pred_check_branch
        %248 = sbr.rel (%p246) target = $region32
      $region31: #{tpu_custom_call.1} parent=5 // pred_region
        // Predicated region
        $region33: #{tpu_custom_call.1} parent=31 // pred_check
          %p249 = pneg %p56
        $region34: #{tpu_custom_call.1} parent=31 // pred_check_branch
          %251 = sbr.rel (%p249) target = $region36
        $region35: #{tpu_custom_call.1} parent=31 // pred_region
          %s252 = sand.u32 %s46, 1
          %s253 = scalar_lea.sflag [#allocation5], %s252
          %s254 = sand.u32 %s46, 1
          %s255 = smul.addr %s254, 24
          %s256 = scalar_lea.vmem [#allocation4], %s255
          %s257 = smul.u32 6, %s30
          %s259 = ssub.s32 384, 384
          %260 = vsyncadd %s253, %s259
          %s261 = smul.addr %s29, 6
          %s262 = sadd.s32 %s257, %s261
          %s263 = smul.addr %s262, 64
          %s264 = scalar_lea.hbm %s0, %s263
          %s265 = sshll.u32 %s256, 4
          %s266 = int_to_ptr.vmem [resolvable:$true] %s265
          %271 = dma.hbm_to_vmem [thread:$0]  %s264, 384, %s266, %s253, 64, 64, 4
        $region36: #{tpu_custom_call.1} parent=31 // pred_fallthru
          _
        // Predicated region
        $region37: #{tpu_custom_call.1} parent=31 // pred_check
          %p272 = pneg %p82
        $region38: #{tpu_custom_call.1} parent=31 // pred_check_branch
          %274 = sbr.rel (%p272) target = $region40
        $region39: #{tpu_custom_call.1} parent=31 // pred_region
          %s275 = sand.u32 %s22, 1
          %s276 = scalar_lea.sflag [#allocation8], %s275
          %s277 = sand.u32 %s72, 1
          %s278 = smul.addr %s277, 16
          %s279 = scalar_lea.vmem [#allocation7], %s278
          %s281 = ssub.s32 256, 256
          %282 = vsyncadd %s276, %s281
          %s283 = smul.addr %s29, 4
          %s284 = smul.addr %s283, 64
          %s285 = scalar_lea.hbm %s1, %s284
          %s286 = sshll.u32 %s279, 4
          %s287 = int_to_ptr.vmem [resolvable:$true] %s286
          %292 = dma.hbm_to_vmem [thread:$0]  %s285, 256, %s287, %s276, 64, 64, 4
        $region40: #{tpu_custom_call.1} parent=31 // pred_fallthru
          _
      $region32: #{tpu_custom_call.1} parent=5 // pred_fallthru
        _
      %p293 = scmp.le.s32.totalorder 1, %s22
      %p294 = scmp.lt.s32.totalorder %s22, 3
      %p295 = pnand %p293, %p294
      %p296 = pneg %p295
      // Predicated region
      $region41: #{tpu_custom_call.1} parent=5 // pred_check
        _
      $region42: #{tpu_custom_call.1} parent=5 // pred_check_branch
        %298 = sbr.rel (%p295) target = $region44
      $region43: #{tpu_custom_call.1} parent=5 // pred_region
        %s299 = ssub.s32 %s22, 1
        %s300 = sand.u32 %s49, 1
        %s301 = scalar_lea.sflag [#allocation5], %s300
        %s302 = sand.u32 %s49, 1
        %s303 = smul.addr %s302, 24
        %s304 = scalar_lea.vmem [#allocation4], %s303
        // Predicated region
        $region45: #{tpu_custom_call.1} parent=43 // pred_check
          %p305 = pneg %p62
        $region46: #{tpu_custom_call.1} parent=43 // pred_check_branch
          %307 = sbr.rel (%p305) target = $region48
        $region47: #{tpu_custom_call.1} parent=43 // pred_region
          %308 = dma.done %s301, 384
        $region48: #{tpu_custom_call.1} parent=43 // pred_fallthru
          _
        %s309 = sand.u32 %s27, 1
        %s310 = scalar_lea.sflag [#allocation8], %s309
        %s311 = sand.u32 %s75, 1
        %s312 = smul.addr %s311, 16
        %s313 = scalar_lea.vmem [#allocation7], %s312
        // Predicated region
        $region49: #{tpu_custom_call.1} parent=43 // pred_check
          %p314 = pneg %p88
        $region50: #{tpu_custom_call.1} parent=43 // pred_check_branch
          %316 = sbr.rel (%p314) target = $region52
        $region51: #{tpu_custom_call.1} parent=43 // pred_region
          %317 = dma.done %s310, 256
        $region52: #{tpu_custom_call.1} parent=43 // pred_fallthru
          _
        // Predicated region
        $region53: #{tpu_custom_call.1} parent=43 // pred_check
          %p318 = pneg %p109
        $region54: #{tpu_custom_call.1} parent=43 // pred_check_branch
          %320 = sbr.rel (%p318) target = $region56
        $region55: #{tpu_custom_call.1} parent=43 // pred_region
          %321 = dma.done [#allocation8], 1024
        $region56: #{tpu_custom_call.1} parent=43 // pred_fallthru
          _
        // Predicated region
        $region57: #{tpu_custom_call.1} parent=43 // pred_check
          %p322 = pneg %p151
        $region58: #{tpu_custom_call.1} parent=43 // pred_check_branch
          %324 = sbr.rel (%p322) target = $region60
        $region59: #{tpu_custom_call.1} parent=43 // pred_region
          %325 = dma.done [#allocation11], 1024
        $region60: #{tpu_custom_call.1} parent=43 // pred_fallthru
          _
        %s326 = sand.u32 %s49, 1
        %s327 = scalar_lea.sflag [#allocation5], %s326
        %s328 = sand.u32 %s49, 1
        %s329 = smul.addr %s328, 24
        %s330 = scalar_lea.vmem [#allocation4], %s329
        %p331 = pneg %p62
        %p332 = pneg %p59
        %s333 = sand.u32 %s27, 1
        %s334 = scalar_lea.sflag [#allocation8], %s333
        %s335 = sand.u32 %s75, 1
        %s336 = smul.addr %s335, 16
        %s337 = scalar_lea.vmem [#allocation7], %s336
        %p338 = pneg %p88
        %p339 = pneg %p85
        %p340 = pneg %p109
        %p341 = pneg %p106
        %p342 = pneg %p130
        %p343 = pneg %p127
        %p344 = pneg %p151
        %p345 = pneg %p148
        %p346 = pneg %p172
        %p347 = pneg %p169
        %p348 = pneg %p198
        %p349 = pneg %p195
        %s350 = sand.u32 %s185, 1
        %s351 = scalar_lea.sflag [#allocation6], %s350
        %s352 = sand.u32 %s185, 1
        %s353 = smul.addr %s352, 2
        %s354 = scalar_lea.vmem [#allocation12], %s353
        %s355 = smul.u32 6, %s32
        %v357 = vld [vmem:[%s304] sm:$0xf]
        %v358 = vld [vmem:[%s304 + $0x4] sm:$0xf]
        %v359 = vld [vmem:[%s304 + $0x8] sm:$0xf]
        %v360 = vld [vmem:[%s304 + $0xc] sm:$0xf]
        %v361 = vld [vmem:[%s304 + $0x10] sm:$0xf]
        %v362 = vld [vmem:[%s304 + $0x14] sm:$0xf]
        %v363 = vld [vmem:[#allocation9] sm:$0xf]
        %v364 = vld [vmem:[#allocation9 + $0x4] sm:$0xf]
        %v365 = vld [vmem:[#allocation9 + $0x8] sm:$0xf]
        %v366 = vld [vmem:[#allocation9 + $0xc] sm:$0xf]
        %v367 = vld [vmem:[#allocation9 + $0x10] sm:$0xf]
        %v368 = vld [vmem:[#allocation9 + $0x14] sm:$0xf]
        %v369 = vld [vmem:[#allocation9 + $0x18] sm:$0xf]
        %v370 = vld [vmem:[#allocation9 + $0x1c] sm:$0xf]
        %v371 = vld [vmem:[#allocation9 + $0x20] sm:$0xf]
        %v372 = vld [vmem:[#allocation9 + $0x24] sm:$0xf]
        %v373 = vld [vmem:[#allocation9 + $0x28] sm:$0xf]
        %v374 = vld [vmem:[#allocation9 + $0x2c] sm:$0xf]
        %v375 = vld [vmem:[#allocation9 + $0x30] sm:$0xf]
        %v376 = vld [vmem:[#allocation9 + $0x34] sm:$0xf]
        %v377 = vld [vmem:[#allocation9 + $0x38] sm:$0xf]
        %v378 = vld [vmem:[#allocation9 + $0x3c] sm:$0xf]
        %v379 = vld [vmem:[%s3] sm:$0x1]
        %v381 = vlaneseq
        %v382 = vshrl.u32 %v381, 7
        %v383 = vsub.s32 0, %v382
        %v384 = vrot.slane %v379, %v383
        %v392 = vunpack.c.l.b16 %v357
        %v393 = vunpack.c.l.b16 %v358
        %v394 = vunpack.c.l.b16 %v359
        %v395 = vunpack.c.l.b16 %v360
        %v396 = vunpack.c.l.b16 %v361
        %v397 = vunpack.c.l.b16 %v362
        %v398 = vpack.c.b16 %v393, %v392
        %v399 = vpack.c.b16 %v395, %v394
        %v400 = vpack.c.b16 %v397, %v396
        %v420 = vunpack.c.l.b16 %v363
        %v421 = vunpack.c.l.b16 %v364
        %v422 = vunpack.c.l.b16 %v365
        %v423 = vunpack.c.l.b16 %v366
        %v424 = vunpack.c.l.b16 %v367
        %v425 = vunpack.c.l.b16 %v368
        %v426 = vunpack.c.l.b16 %v369
        %v427 = vunpack.c.l.b16 %v370
        %v428 = vunpack.c.l.b16 %v371
        %v429 = vunpack.c.l.b16 %v372
        %v430 = vunpack.c.l.b16 %v373
        %v431 = vunpack.c.l.b16 %v374
        %v432 = vunpack.c.l.b16 %v375
        %v433 = vunpack.c.l.b16 %v376
        %v434 = vunpack.c.l.b16 %v377
        %v435 = vunpack.c.l.b16 %v378
        %v436 = vpack.c.b16 %v421, %v420
        %v437 = vpack.c.b16 %v423, %v422
        %v438 = vpack.c.b16 %v425, %v424
        %v439 = vpack.c.b16 %v427, %v426
        %v440 = vpack.c.b16 %v429, %v428
        %v441 = vpack.c.b16 %v431, %v430
        %v442 = vpack.c.b16 %v433, %v432
        %v443 = vpack.c.b16 %v435, %v434
        %452 = vmatprep.subr.bf16.mxu0 0
        %453 = vmatpush1.bf16.msra.mxu0 %v443
        %454 = vmatprep.subr.bf16.mxu0 0
        %455 = vmatpush1.bf16.msra.mxu0 %v442
        %456 = vmatprep.subr.bf16.mxu0 0
        %457 = vmatpush1.bf16.msra.mxu0 %v441
        %458 = vmatprep.subr.bf16.mxu0 0
        %459 = vmatpush1.bf16.msra.mxu0 %v440
        %460 = vmatprep.subr.bf16.mxu0 0
        %461 = vmatpush1.bf16.msra.mxu0 %v439
        %462 = vmatprep.subr.bf16.mxu0 0
        %463 = vmatpush1.bf16.msra.mxu0 %v438
        %464 = vmatprep.subr.bf16.mxu0 0
        %465 = vmatpush1.bf16.msra.mxu0 %v437
        %466 = vmatprep.subr.bf16.mxu0 0
        %467 = vmatpush1.bf16.msra.mxu0 %v436
        %468 = vmatprep.subr.bf16.mxu0 0
        %469 = vmatpush2.bf16.msra.mxu0 0
        %470 = vmatprep.subr.bf16.mxu0 0
        %471 = vmatpush2.bf16.msra.mxu0 0
        %472 = vmatprep.subr.bf16.mxu0 0
        %473 = vmatpush2.bf16.msra.mxu0 0
        %474 = vmatprep.subr.bf16.mxu0 0
        %475 = vmatpush2.bf16.msra.mxu0 0
        %476 = vmatprep.subr.bf16.mxu0 0
        %477 = vmatpush2.bf16.msra.mxu0 0
        %478 = vmatprep.subr.bf16.mxu0 0
        %479 = vmatpush2.bf16.msra.mxu0 0
        %480 = vmatprep.subr.bf16.mxu0 0
        %481 = vmatpush2.bf16.msra.mxu0 0
        %482 = vmatprep.subr.bf16.mxu0 0
        %483 = vmatpush2.bf16.msra.mxu0 0
        %484 = vmatprep.mubr.bf16.mxu0 0
        %485 = vmatmul.mubr.bf16.gmra.mxu0 %v398
        %v486 = vpop.f32.mrf.mxu0
        %v487 = vadd.f32 %v384, %v486
        %v488 = vpop.f32.mrf.mxu0
        %v489 = vpop.f32.mrf.mxu0
        %v490 = vadd.f32 %v384, %v489
        %v491 = vpop.f32.mrf.mxu0
        %492 = vmatprep.mubr.bf16.mxu0 0
        %493 = vmatmul.mubr.bf16.gmra.mxu0 %v399
        %v494 = vpop.f32.mrf.mxu0
        %v495 = vadd.f32 %v384, %v494
        %v496 = vpop.f32.mrf.mxu0
        %v497 = vpop.f32.mrf.mxu0
        %v498 = vadd.f32 %v384, %v497
        %v499 = vpop.f32.mrf.mxu0
        %500 = vmatprep.mubr.bf16.mxu0 0
        %501 = vmatmul.mubr.bf16.gmra.mxu0 %v400
        %v502 = vpop.f32.mrf.mxu0
        %v503 = vadd.f32 %v384, %v502
        %v504 = vpop.f32.mrf.mxu0
        %v505 = vpop.f32.mrf.mxu0
        %v506 = vadd.f32 %v384, %v505
        %v507 = vpop.f32.mrf.mxu0
        %508 = vdwg.mxu0
        %v509 = vtanh.pop %v487
        %v510 = vtanh.pop %v490
        %v511 = vtanh.pop %v495
        %v512 = vtanh.pop %v498
        %v513 = vtanh.pop %v503
        %v514 = vtanh.pop %v506
        %v515 = vadd.f32 %v509, %v510
        %v516 = vadd.f32 %v515, %v511
        %v517 = vadd.f32 %v516, %v512
        %v518 = vadd.f32 %v517, %v513
        %v519 = vadd.f32 %v518, %v514
        %v520 = vrot.slane %v519, 4
        %v521 = vadd.f32 %v519, %v520
        %v522 = vrot.slane %v521, 2
        %v523 = vadd.f32 %v521, %v522
        %v524 = vrot.slane %v523, 1
        %v525 = vadd.f32 %v523, %v524
        %p526 = scmp.eq.s32.totalorder %s32, 0
        // Predicated region
        $region61: #{tpu_custom_call.1} parent=43 // pred_check
          %p527 = pneg %p526
        $region62: #{tpu_custom_call.1} parent=43 // pred_check_branch
          %529 = sbr.rel (%p527) target = $region64
        $region63: #{tpu_custom_call.1} parent=43 // pred_region
          %530 = vst [vmem:[#allocation2] sm:$0x1] %v525
          %v531 = vld [vmem:[%s313] sm:$0xf]
          %v532 = vld [vmem:[%s313 + $0x4] sm:$0xf]
          %v533 = vld [vmem:[%s313 + $0x8] sm:$0xf]
          %v534 = vld [vmem:[%s313 + $0xc] sm:$0xf]
          %v535 = vld [vmem:[#allocation10] sm:$0xf]
          %v536 = vld [vmem:[#allocation10 + $0x4] sm:$0xf]
          %v537 = vld [vmem:[#allocation10 + $0x8] sm:$0xf]
          %v538 = vld [vmem:[#allocation10 + $0xc] sm:$0xf]
          %v539 = vld [vmem:[#allocation10 + $0x10] sm:$0xf]
          %v540 = vld [vmem:[#allocation10 + $0x14] sm:$0xf]
          %v541 = vld [vmem:[#allocation10 + $0x18] sm:$0xf]
          %v542 = vld [vmem:[#allocation10 + $0x1c] sm:$0xf]
          %v543 = vld [vmem:[#allocation10 + $0x20] sm:$0xf]
          %v544 = vld [vmem:[#allocation10 + $0x24] sm:$0xf]
          %v545 = vld [vmem:[#allocation10 + $0x28] sm:$0xf]
          %v546 = vld [vmem:[#allocation10 + $0x2c] sm:$0xf]
          %v547 = vld [vmem:[#allocation10 + $0x30] sm:$0xf]
          %v548 = vld [vmem:[#allocation10 + $0x34] sm:$0xf]
          %v549 = vld [vmem:[#allocation10 + $0x38] sm:$0xf]
          %v550 = vld [vmem:[#allocation10 + $0x3c] sm:$0xf]
          %v551 = vld [vmem:[%s5] sm:$0x1]
          %v553 = vlaneseq
          %v554 = vshrl.u32 %v553, 7
          %v555 = vsub.s32 0, %v554
          %v556 = vrot.slane %v551, %v555
          %v562 = vunpack.c.l.b16 %v531
          %v563 = vunpack.c.l.b16 %v532
          %v564 = vunpack.c.l.b16 %v533
          %v565 = vunpack.c.l.b16 %v534
          %v566 = vpack.c.b16 %v563, %v562
          %v567 = vpack.c.b16 %v565, %v564
          %v586 = vunpack.c.l.b16 %v535
          %v587 = vunpack.c.l.b16 %v536
          %v588 = vunpack.c.l.b16 %v537
          %v589 = vunpack.c.l.b16 %v538
          %v590 = vunpack.c.l.b16 %v539
          %v591 = vunpack.c.l.b16 %v540
          %v592 = vunpack.c.l.b16 %v541
          %v593 = vunpack.c.l.b16 %v542
          %v594 = vunpack.c.l.b16 %v543
          %v595 = vunpack.c.l.b16 %v544
          %v596 = vunpack.c.l.b16 %v545
          %v597 = vunpack.c.l.b16 %v546
          %v598 = vunpack.c.l.b16 %v547
          %v599 = vunpack.c.l.b16 %v548
          %v600 = vunpack.c.l.b16 %v549
          %v601 = vunpack.c.l.b16 %v550
          %v602 = vpack.c.b16 %v587, %v586
          %v603 = vpack.c.b16 %v589, %v588
          %v604 = vpack.c.b16 %v591, %v590
          %v605 = vpack.c.b16 %v593, %v592
          %v606 = vpack.c.b16 %v595, %v594
          %v607 = vpack.c.b16 %v597, %v596
          %v608 = vpack.c.b16 %v599, %v598
          %v609 = vpack.c.b16 %v601, %v600
          %618 = vmatprep.subr.bf16.mxu0 0
          %619 = vmatpush1.bf16.msra.mxu0 %v609
          %620 = vmatprep.subr.bf16.mxu0 0
          %621 = vmatpush1.bf16.msra.mxu0 %v608
          %622 = vmatprep.subr.bf16.mxu0 0
          %623 = vmatpush1.bf16.msra.mxu0 %v607
          %624 = vmatprep.subr.bf16.mxu0 0
          %625 = vmatpush1.bf16.msra.mxu0 %v606
          %626 = vmatprep.subr.bf16.mxu0 0
          %627 = vmatpush1.bf16.msra.mxu0 %v605
          %628 = vmatprep.subr.bf16.mxu0 0
          %629 = vmatpush1.bf16.msra.mxu0 %v604
          %630 = vmatprep.subr.bf16.mxu0 0
          %631 = vmatpush1.bf16.msra.mxu0 %v603
          %632 = vmatprep.subr.bf16.mxu0 0
          %633 = vmatpush1.bf16.msra.mxu0 %v602
          %634 = vmatprep.subr.bf16.mxu0 0
          %635 = vmatpush2.bf16.msra.mxu0 0
          %636 = vmatprep.subr.bf16.mxu0 0
          %637 = vmatpush2.bf16.msra.mxu0 0
          %638 = vmatprep.subr.bf16.mxu0 0
          %639 = vmatpush2.bf16.msra.mxu0 0
          %640 = vmatprep.subr.bf16.mxu0 0
          %641 = vmatpush2.bf16.msra.mxu0 0
          %642 = vmatprep.subr.bf16.mxu0 0
          %643 = vmatpush2.bf16.msra.mxu0 0
          %644 = vmatprep.subr.bf16.mxu0 0
          %645 = vmatpush2.bf16.msra.mxu0 0
          %646 = vmatprep.subr.bf16.mxu0 0
          %647 = vmatpush2.bf16.msra.mxu0 0
          %648 = vmatprep.subr.bf16.mxu0 0
          %649 = vmatpush2.bf16.msra.mxu0 0
          %650 = vmatprep.mubr.bf16.mxu0 0
          %651 = vmatmul.mubr.bf16.gmra.mxu0 %v566
          %v652 = vpop.f32.mrf.mxu0
          %v653 = vadd.f32 %v556, %v652
          %v654 = vpop.f32.mrf.mxu0
          %v655 = vpop.f32.mrf.mxu0
          %v656 = vadd.f32 %v556, %v655
          %v657 = vpop.f32.mrf.mxu0
          %658 = vmatprep.mubr.bf16.mxu0 0
          %659 = vmatmul.mubr.bf16.gmra.mxu0 %v567
          %v660 = vpop.f32.mrf.mxu0
          %v661 = vadd.f32 %v556, %v660
          %v662 = vpop.f32.mrf.mxu0
          %v663 = vpop.f32.mrf.mxu0
          %v664 = vadd.f32 %v556, %v663
          %v665 = vpop.f32.mrf.mxu0
          %666 = vdwg.mxu0
          %v667 = vtanh.pop %v653
          %v668 = vtanh.pop %v656
          %v669 = vtanh.pop %v661
          %v670 = vtanh.pop %v664
          %v671 = vadd.f32 %v667, %v668
          %v672 = vadd.f32 %v671, %v669
          %v673 = vadd.f32 %v672, %v670
          %v674 = vrot.slane %v673, 4
          %v675 = vadd.f32 %v673, %v674
          %v676 = vrot.slane %v675, 2
          %v677 = vadd.f32 %v675, %v676
          %v678 = vrot.slane %v677, 1
          %v679 = vadd.f32 %v677, %v678
          %680 = vst [vmem:[#allocation3] sm:$0x1] %v679
        $region64: #{tpu_custom_call.1} parent=43 // pred_fallthru
          _
        %p681 = scmp.gt.s32.totalorder %s32, 0
        // Predicated region
        $region65: #{tpu_custom_call.1} parent=43 // pred_check
          %p682 = pneg %p681
        $region66: #{tpu_custom_call.1} parent=43 // pred_check_branch
          %684 = sbr.rel (%p682) target = $region68
        $region67: #{tpu_custom_call.1} parent=43 // pred_region
          %v685 = vld [vmem:[#allocation2] sm:$0x1]
          %v686 = vadd.f32 %v685, %v525
          %687 = vst [vmem:[#allocation2] sm:$0x1] %v686
        $region68: #{tpu_custom_call.1} parent=43 // pred_fallthru
          _
        // Predicated region
        $region69: #{tpu_custom_call.1} parent=43 // pred_check
          %p688 = pneg %p526
        $region70: #{tpu_custom_call.1} parent=43 // pred_check_branch
          %690 = sbr.rel (%p688) target = $region72
        $region71: #{tpu_custom_call.1} parent=43 // pred_region
          %v691 = vld [vmem:[#allocation2] sm:$0x1]
          %v692 = vld [vmem:[%s3] sm:$0x1]
          %v693 = vtanh.pop %v692
          %v694 = vmul.f32 %v693, 12.0
          %v695 = vsub.f32 %v691, %v694
          %v696 = vld [vmem:[#allocation3] sm:$0x1]
          %v697 = vld [vmem:[%s5] sm:$0x1]
          %v698 = vtanh.pop %v697
          %v699 = vmul.f32 %v698, 14.0
          %v700 = vsub.f32 %v696, %v699
          %v701 = vmul.f32 %v695, 0.027777778
          %v702 = vmul.f32 %v700, 0.055555556
          %v705 = vcombine.low %v701, %v702
          %v707 = vunpack.c.l.s4 1966171168
          %v708 = vunpack.c.0.s8 %v707
          %v709 = vlaneseq
          %v710 = vshrl.u32 %v709, 7
          %v711 = vsub.s32 %v708, %v710
          %v712 = vrot.slane %v705, %v711
          %v714 = vunpack.c.l.s4 1966171168
          %v715 = vunpack.c.0.s8 %v714
          %v716 = vlaneseq
          %v717 = vshrl.u32 %v716, 7
          %v718 = vsub.s32 %v715, %v717
          %v719 = vrot.slane %v712, %v718
          %v721 = vlaneseq
          %vm722 = vcmp.ge.s32.totalorder %v721, 0
          %vm723 = vcmp.lt.s32.totalorder %v721, 256
          %vm724 = vmand %vm722, %vm723
          %725 = vst.msk [vmem:[%s354] sm:$0x3] %vm724, %v719
        $region72: #{tpu_custom_call.1} parent=43 // pred_fallthru
          _
        %s726 = sand.u32 %s185, 1
        %s727 = scalar_lea.sflag [#allocation6], %s726
        %s728 = sand.u32 %s185, 1
        %s729 = smul.addr %s728, 2
        %s730 = scalar_lea.vmem [#allocation12], %s729
        // Predicated region
        $region73: #{tpu_custom_call.1} parent=43 // pred_check
          %p731 = pneg %p195
        $region74: #{tpu_custom_call.1} parent=43 // pred_check_branch
          %733 = sbr.rel (%p731) target = $region76
        $region75: #{tpu_custom_call.1} parent=43 // pred_region
          %s735 = ssub.s32 32, 32
          %736 = vsyncadd %s727, %s735
          %s737 = smul.addr %s31, 2
          %s738 = smul.addr %s737, 16
          %s739 = scalar_lea.hbm %s6, %s738
          %s741 = sshll.u32 %s730, 4
          %s742 = int_to_ptr.vmem [resolvable:$true] %s741
          %744 = dma.vmem_to_hbm [thread:$0]  %s742, 32, %s739, %s727
        $region76: #{tpu_custom_call.1} parent=43 // pred_fallthru
          _
      $region44: #{tpu_custom_call.1} parent=5 // pred_fallthru
        _
      %p745 = scmp.le.s32.totalorder 2, %s22
      // Predicated region
      $region77: #{tpu_custom_call.1} parent=5 // pred_check
        %p746 = pneg %p745
      $region78: #{tpu_custom_call.1} parent=5 // pred_check_branch
        %748 = sbr.rel (%p746) target = $region80
      $region79: #{tpu_custom_call.1} parent=5 // pred_region
        %s749 = ssub.s32 %s22, 2
        // Predicated region
        $region81: #{tpu_custom_call.1} parent=79 // pred_check
          %p750 = pneg %p201
        $region82: #{tpu_custom_call.1} parent=79 // pred_check_branch
          %752 = sbr.rel (%p750) target = $region84
        $region83: #{tpu_custom_call.1} parent=79 // pred_region
          %s753 = sand.u32 %s186, 1
          %s754 = scalar_lea.sflag [#allocation6], %s753
          %s755 = sand.u32 %s186, 1
          %s756 = smul.addr %s755, 2
          %s757 = scalar_lea.vmem [#allocation12], %s756
          %758 = dma.done %s754, 32
        $region84: #{tpu_custom_call.1} parent=79 // pred_fallthru
          _
      $region80: #{tpu_custom_call.1} parent=5 // pred_fallthru
        _
    $region6: #{tpu_custom_call.1} parent=1 // loop_footer
      %s26 = sadd.s32 1, %s22
    $region7: #{tpu_custom_call.1} parent=1 // loop_footer_branch
      %21 = sbr.rel target = $region3
    $region8: #{tpu_custom_call.1} parent=1 // loop_exit
      _
    %759 = vsyncpa [#allocation5], 1
    %s760 = scalar_lea.sflag [#allocation5], 1
    %761 = vsyncpa %s760, 1
    %762 = vsyncpa [#allocation8], 1
    %s763 = scalar_lea.sflag [#allocation8], 1
    %764 = vsyncpa %s763, 1
    %765 = vsyncpa [#allocation11], 1
    %766 = vsyncpa [#allocation6], 1
    %s767 = scalar_lea.sflag [#allocation6], 1
    %768 = vsyncpa %s767, 1

</llo_original>
